<compile_context>
chip_gen: v7x
topology: tpu7x:2x2x1
jax: 0.10.0
libtpu: 0.0.40
codegen_flags: <defaults>
</compile_context>

<pallas_src>
import functools

import jax
import jax.numpy as jnp
from jax.experimental import pallas as pl
from jax.experimental.pallas import tpu as pltpu


def _round_up(a: int, b: int) -> int:
    return (a + b - 1) // b * b


def _make_single_chunk_kernel(inv_hw: float):
    """The whole H*W axis fits in one lane chunk: reduce directly, no scratch."""

    def kernel(x_ref, o_ref):
        x = x_ref[...]                                              # (TM, HW)
        mx = jnp.max(x, axis=-1, keepdims=True)                     # (TM, 1)
        sm = jnp.sum(x, axis=-1, keepdims=True, dtype=jnp.float32)  # (TM, 1) f32
        o_ref[:, 0:1] = mx.astype(o_ref.dtype)
        o_ref[:, 1:2] = (sm * inv_hw).astype(o_ref.dtype)

    return kernel


def _make_multi_chunk_kernel(hw: int, chunk: int, needs_mask: bool, inv_hw: float):
    """H*W tiled into `chunk`-lane blocks (chunk % 128 == 0), reduction axis last.

    Per chunk: element-wise max/add into (TM, 128) f32 accumulators (VPU only).
    The cross-lane (XLU) reduce runs once per row block, at the last chunk.
    Columns >= hw (ragged edge block: unspecified values) are masked out.
    """
    n_slices = chunk // 128

    def kernel(x_ref, o_ref, max_acc, sum_acc):
        k = pl.program_id(1)

        @pl.when(k == 0)
        def _():
            max_acc[...] = jnp.full_like(max_acc, -jnp.inf)
            sum_acc[...] = jnp.zeros_like(sum_acc)

        x = x_ref[...]                                   # (TM, chunk)
        m = max_acc[...]
        s = sum_acc[...]
        if needs_mask:
            lane = jax.lax.broadcasted_iota(jnp.int32, (x.shape[0], 128), 1)
            base = k * chunk
        for j in range(n_slices):
            xs = x[:, j * 128:(j + 1) * 128].astype(jnp.float32)
            if needs_mask:
                valid = (base + j * 128) + lane < hw
                m = jnp.maximum(m, jnp.where(valid, xs, -jnp.inf))
                s = s + jnp.where(valid, xs, 0.0)
            else:
                m = jnp.maximum(m, xs)
                s = s + xs
        max_acc[...] = m
        sum_acc[...] = s

        @pl.when(k == pl.num_programs(1) - 1)
        def _():
            row_max = jnp.max(max_acc[...], axis=-1, keepdims=True)
            row_sum = jnp.sum(sum_acc[...], axis=-1, keepdims=True)
            o_ref[:, 0:1] = row_max.astype(o_ref.dtype)
            o_ref[:, 1:2] = (row_sum * inv_hw).astype(o_ref.dtype)

    return kernel


@functools.partial(jax.jit,
                   static_argnames=("max_single_chunk_bytes", "chunk_elems"))
def adaptive_concat_pool2d(x, *, max_single_chunk_bytes: int = 64 * 1024,
                           chunk_elems: int = 8192):
    """x: (N, C, H, W) -> (N, 2*C, 1, 1)  ([max-pool | avg-pool] along dim 1)."""
    assert chunk_elems % 128 == 0
    N, C, H, W = x.shape
    NC, HW = N * C, H * W
    itemsize = jnp.dtype(x.dtype).itemsize
    sub = max(8, 32 // itemsize)          # sublane packing: 8 f32, 16 bf16, 32 int8
    inv_hw = 1.0 / float(HW)
    target_tile_bytes = 4 * 1024 * 1024

    single_chunk = HW * itemsize <= max_single_chunk_bytes
    if single_chunk:
        chunk = HW                        # full extent along lanes: always legal
        n_k = 1
        needs_mask = False
    else:
        chunk = min(chunk_elems, _round_up(HW, 128))
        n_k = pl.cdiv(HW, chunk)
        needs_mask = (HW % chunk) != 0

    lane_pad = _round_up(chunk, 128)      # physical lane padding in VMEM
    tm = max(sub, (target_tile_bytes // (lane_pad * itemsize)) // sub * sub)
    tm = min(tm, 8192)
    if NC <= tm:
        tm = NC                           # full extent along rows: always legal
    n_rows = pl.cdiv(NC, tm)

    phys_tile = _round_up(tm, sub) * lane_pad * itemsize
    vmem_limit = int(min(32 * 1024 * 1024,
                         max(16 * 1024 * 1024, 4 * phys_tile + 4 * 1024 * 1024)))

    x2 = x.reshape(NC, HW)                # metadata-only reshape, no HBM copy

    if single_chunk:
        out2 = pl.pallas_call(
            _make_single_chunk_kernel(inv_hw),
            out_shape=jax.ShapeDtypeStruct((NC, 2), x.dtype),
            grid_spec=pltpu.PrefetchScalarGridSpec(
                num_scalar_prefetch=0,
                grid=(n_rows,),
                in_specs=[pl.BlockSpec((tm, HW), lambda i: (i, 0))],
                out_specs=pl.BlockSpec((tm, 2), lambda i: (i, 0)),
            ),
            compiler_params=pltpu.CompilerParams(
                dimension_semantics=("parallel",),
                vmem_limit_bytes=vmem_limit,
            ),
        )(x2)
    else:
        out2 = pl.pallas_call(
            _make_multi_chunk_kernel(HW, chunk, needs_mask, inv_hw),
            out_shape=jax.ShapeDtypeStruct((NC, 2), x.dtype),
            grid_spec=pltpu.PrefetchScalarGridSpec(
                num_scalar_prefetch=0,
                grid=(n_rows, n_k),                       # reduction axis last
                in_specs=[pl.BlockSpec((tm, chunk), lambda i, k: (i, k))],
                out_specs=pl.BlockSpec((tm, 2), lambda i, k: (i, 0)),
                scratch_shapes=[pltpu.VMEM((tm, 128), jnp.float32),   # running max
                                pltpu.VMEM((tm, 128), jnp.float32)],  # running sum
            ),
            compiler_params=pltpu.CompilerParams(
                dimension_semantics=("parallel", "arbitrary"),
                vmem_limit_bytes=vmem_limit,
            ),
        )(x2)

    mx = out2[:, 0].reshape(N, C)
    av = out2[:, 1].reshape(N, C)
    return jnp.concatenate([mx, av], axis=1).reshape(N, 2 * C, 1, 1)


def _ref(x):
    return jnp.concatenate([jnp.max(x, axis=(2, 3), keepdims=True),
                            jnp.mean(x, axis=(2, 3), keepdims=True)], axis=1)


if __name__ == "__main__":
    key = jax.random.PRNGKey(0)

    # Primary check (small shapes consistent with the module's forward).
    N, C, H, W = 2, 4, 16, 16
    x = jax.random.normal(key, (N, C, H, W), dtype=jnp.float32)
    out = jax.block_until_ready(adaptive_concat_pool2d(x))
    assert out.shape == (N, 2 * C, 1, 1), out.shape
    assert jnp.allclose(out, _ref(x), atol=1e-5, rtol=1e-5), "mismatch (main path)"

    # Non-128-multiple spatial extent (still the single-chunk path).
    x_odd = jax.random.normal(jax.random.PRNGKey(1), (2, 3, 7, 7), dtype=jnp.float32)
    out_odd = jax.block_until_ready(adaptive_concat_pool2d(x_odd))
    assert jnp.allclose(out_odd, _ref(x_odd), atol=1e-5, rtol=1e-5), "mismatch (7x7)"

    # Exercise the tiled-reduction (large H*W) path on a small, ragged input.
    x_big = jax.random.normal(jax.random.PRNGKey(2), (2, 3, 9, 31), dtype=jnp.float32)
    out_big = jax.block_until_ready(
        adaptive_concat_pool2d(x_big, max_single_chunk_bytes=256, chunk_elems=128))
    assert jnp.allclose(out_big, _ref(x_big), atol=1e-5, rtol=1e-5), "mismatch (tiled)"

    print("KERNEL_OK")
</pallas_src>

<mosaic_0001>
module attributes {stable_mosaic.version = 11 : i64} {
  func.func @kernel(%arg0: i32, %arg1: memref<8x256xf32, #tpu.memory_space<vmem>>, %arg2: memref<8x2xf32, #tpu.memory_space<vmem>>) attributes {dimension_semantics = [#tpu.dimension_semantics<parallel>], iteration_bounds = array<i64: 1>, scalar_prefetch = 0 : i64, scratch_operands = 0 : i64, tpu.core_type = #tpu.core_type<tc>, window_params = [{transform_indices = @transform_0, window_bounds = array<i64: 8, 256>}, {transform_indices = @transform_1, window_bounds = array<i64: 8, 2>}]} {
    %c0 = arith.constant 0 : index
    %c0_0 = arith.constant 0 : index
    %0 = vector.load %arg1[%c0, %c0_0] : memref<8x256xf32, #tpu.memory_space<vmem>>, vector<8x256xf32>
    %cst = arith.constant dense<0xFF800000> : vector<8xf32>
    %1 = vector.multi_reduction <maximumf>, %0, %cst [1] : vector<8x256xf32> to vector<8xf32>
    %2 = vector.shape_cast %1 : vector<8xf32> to vector<8x1xf32>
    %cst_1 = arith.constant dense<0.000000e+00> : vector<8xf32>
    %3 = vector.multi_reduction <add>, %0, %cst_1 [1] : vector<8x256xf32> to vector<8xf32>
    %4 = vector.shape_cast %3 : vector<8xf32> to vector<8x1xf32>
    %c0_2 = arith.constant 0 : index
    %c0_3 = arith.constant 0 : index
    %5 = vector.load %arg2[%c0_2, %c0_3] : memref<8x2xf32, #tpu.memory_space<vmem>>, vector<8x1xf32>
    tpu.vector_store %arg2[%c0_2, %c0_3], %2 {strides = array<i32>} : memref<8x2xf32, #tpu.memory_space<vmem>>, vector<8x1xf32>,
    %cst_4 = arith.constant 3.906250e-03 : f32
    %6 = vector.broadcast %cst_4 : f32 to vector<8x1xf32>
    %7 = arith.mulf %4, %6 : vector<8x1xf32>
    %c0_5 = arith.constant 0 : index
    %c1 = arith.constant 1 : index
    %8 = vector.load %arg2[%c0_5, %c1] : memref<8x2xf32, #tpu.memory_space<vmem>>, vector<8x1xf32>
    tpu.vector_store %arg2[%c0_5, %c1], %7 {strides = array<i32>} : memref<8x2xf32, #tpu.memory_space<vmem>>, vector<8x1xf32>,
    return
  }
  func.func @transform_0(%arg0: i32) -> (i32, i32) {
    %c0_i32 = arith.constant 0 : i32
    %c0_i32_0 = arith.constant 0 : i32
    return %arg0, %c0_i32 : i32, i32
  }
  func.func @transform_1(%arg0: i32) -> (i32, i32) {
    %c0_i32 = arith.constant 0 : i32
    %c0_i32_0 = arith.constant 0 : i32
    return %arg0, %c0_i32 : i32, i32
  }
}

</mosaic_0001>

<llo_original>
// kernel: squeeze.2
$region0: #{squeeze.2}
  %s0 = inlined_call_operand.vmem [shape: f32[8], index: 0, kind: input, shape index: {}]
  %s1 = inlined_call_operand.vmem [shape: f32[2,4], index: 1, kind: output, shape index: {}]
  $region1: #{squeeze.2} parent=0
    #allocation0 [shape = 'u8[4096]{0}', space=vmem, size = 0x1000, scoped, tag = 'scoped mem for output reshape']
    #allocation1 [shape = 'u8[4096]{0}', space=vmem, size = 0x1000, scoped, tag = 'scoped mem for input reshape']
    %s3 = sshllo.u32 0, 1
    %v4 = vld [vmem:[%s0] sm:%s3]
    %5 = vst [vmem:[#allocation1] sm:%s3] %v4
    %v6 = vld [vmem:[#allocation1] sm:$0x1]
    %vm7 = vcmask 31744
    %8 = vst.msk [vmem:[#allocation0] sm:$0x1] %vm7, %v6
    %v9 = vld [vmem:[#allocation1] sm:$0x1]
    %10 = vrot.lane.b32.xlu0 %v9, 124
    %v11 = vpop.permute.xlu0 %10
    %vm12 = vcmask 31744
    %s13 = scalar_lea.vmem [#allocation0], 1
    %14 = vst.msk [vmem:[%s13] sm:$0x1] %vm12, %v11
    %s16 = sshllo.u32 0, 2
    %v18 = vld [vmem:[#allocation0] sm:%s16]
    %s19 = sshllo.u32 0, 2
    %20 = vst [vmem:[%s1] sm:%s19] %v18

// kernel: adaptive_concat_pool2d.1
$region0: #{adaptive_concat_pool2d.1}
  #allocation0 [shape = 'u32[]', space=smem, size = 0x4, offset = 0x4, fixed_abs, tag = 'smem constant byte address 0x4 - core index']
  #allocation1 [shape = 'u32[144,128]{1,0:T(1,128)}', space=vmem, size = 0x12000, scoped, tag = 'internal scratch']
  %s0 = inlined_call_operand.vmem [shape: f32[8,256], index: 0, kind: input, shape index: {}]
  %s1 = inlined_call_operand.vmem [shape: f32[8,2], index: 1, kind: output, shape index: {}]
  %s2 = sld [smem:[#allocation0]]
  $region14: #{adaptive_concat_pool2d.1} parent=0
    _
  %s4 = ssub.s32 1, %s2
  %s5 = scalar_select 0, %s4, %s2
  // Predicated region
  $region2: #{adaptive_concat_pool2d.1} parent=0 // pred_check
    _
  $region3: #{adaptive_concat_pool2d.1} parent=0 // pred_check_branch
    %7 = sbr.rel (0) target = $region5
  $region4: #{adaptive_concat_pool2d.1} parent=0 // pred_region
    _
  $region5: #{adaptive_concat_pool2d.1} parent=0 // pred_fallthru
    _
  %v8 = vld [vmem:[%s0] sm:$0xff]
  %v9 = vld [vmem:[%s0 + $0x8] sm:$0xff]
  %v10 = vmax.f32 %v8, %v9
  %11 = vmax.xlane.f32.xlu0 %v10
  %v12 = vpop.xlane.xlu0 %11
  %v13 = vadd.f32 %v8, %v9
  %14 = vadd.xlane.f32.xlu0 %v13
  %v15 = vpop.xlane.xlu0 %14
  %vm16 = vcmask 7168
  %17 = vst.msk [vmem:[%s1] sm:$0xff] %vm16, %v12
  %v18 = vmul.f32 %v15, 0.00390625
  %vm19 = vcmask 15368
  %20 = vst.msk [vmem:[%s1] sm:$0xff] %vm19, %v18
  // Predicated region
  $region6: #{adaptive_concat_pool2d.1} parent=0 // pred_check
    _
  $region7: #{adaptive_concat_pool2d.1} parent=0 // pred_check_branch
    %22 = sbr.rel (0) target = $region9
  $region8: #{adaptive_concat_pool2d.1} parent=0 // pred_region
    _
  $region9: #{adaptive_concat_pool2d.1} parent=0 // pred_fallthru
    _
  // Predicated region
  $region10: #{adaptive_concat_pool2d.1} parent=0 // pred_check
    _
  $region11: #{adaptive_concat_pool2d.1} parent=0 // pred_check_branch
    %24 = sbr.rel (0) target = $region13
  $region12: #{adaptive_concat_pool2d.1} parent=0 // pred_region
    _
  $region13: #{adaptive_concat_pool2d.1} parent=0 // pred_fallthru
    _

</llo_original>
